<compile_context>
chip_gen: v7x
topology: tpu7x:2x2x1
jax: 0.10.0
libtpu: 0.0.40
codegen_flags: <defaults>
</compile_context>

<pallas_src>
import functools

import jax
import jax.numpy as jnp
import numpy as np
from jax.experimental import pallas as pl
from jax.experimental.pallas import tpu as pltpu


def radial_flow_kernel(z_ref, x0_ref, alpha_ref, beta_ref,
                       z_out_ref, lj_out_ref, log_scr,
                       *, flow_length, true_dim, use_mxu_reduce):
    """One batch tile.

    z_ref      : (TB, dim_pad)          VMEM — natural (batch, dim) layout
    x0_ref     : (dim_pad, flow_length) VMEM — reference point per flow (cols)
    alpha_ref  : (flow_length,)         SMEM — alpha = exp(log_alpha)
    beta_ref   : (flow_length,)         SMEM
    z_out_ref  : (TB, dim_pad)          VMEM — natural layout
    lj_out_ref : (1, TB)                VMEM — lane-dense log-jac row
    log_scr    : (2*flow_length, TB)    VMEM scratch — packed log1p arguments
    """
    # Single per-tile XLU transpose: batch -> lane axis for the compute.
    z = jnp.transpose(z_ref[...].astype(jnp.float32))        # (dim_pad, TB)

    # flow_length is a small static constant -> unrolled Python loop.
    for k in range(flow_length):
        alpha = alpha_ref[k]                                  # SMEM scalar
        beta = beta_ref[k]                                    # SMEM scalar
        x0 = x0_ref[:, k:k + 1]                               # (dim_pad, 1)

        z_sub = z - x0                                        # (dim_pad, TB)
        if use_mxu_reduce:
            # dim-reduce on the otherwise-idle MXU (only worth it at dim>=128)
            ones = jnp.ones((1, z_sub.shape[0]), jnp.float32)
            r2 = jnp.dot(ones, z_sub * z_sub,
                         preferred_element_type=jnp.float32)
        else:
            r2 = jnp.sum(z_sub * z_sub, axis=0, keepdims=True)
        r = jnp.sqrt(r2)                                      # (1, TB)
        # exact reciprocal keeps the 1e-5 tolerance;
        # pl.reciprocal(alpha + r, approx=True) is available if relaxed.
        h = 1.0 / (alpha + r)
        bh = beta * h

        z = z + bh * z_sub                                    # radial step

        # Stash log1p arguments; ONE dense log1p after the loop.
        #   log|det J| = (dim-1)*log1p(beta*h) + log1p(beta*alpha*h^2)
        log_scr[k:k + 1, :] = bh
        log_scr[flow_length + k:flow_length + k + 1, :] = (beta * alpha) * (h * h)

    logs = jnp.log1p(log_scr[...])                            # dense (2FL, TB)
    row = jax.lax.broadcasted_iota(jnp.int32, (2 * flow_length, 1), 0)
    w = jnp.where(row < flow_length,
                  jnp.float32(true_dim - 1), jnp.float32(1.0))
    lj_out_ref[...] = jnp.sum(w * logs, axis=0, keepdims=True)

    # Transpose back so the store is in the natural (batch, dim) layout.
    z_out_ref[...] = jnp.transpose(z).astype(z_out_ref.dtype)


def _round_up(x, m):
    return ((x + m - 1) // m) * m


def _vmem_capacity_bytes():
    try:
        return pltpu.get_tpu_info().vmem_capacity_bytes
    except Exception:
        return 64 << 20          # v7x floor (smallest VMEM generation)


def _pick_tile_batch(padded_batch, dim_pad, flow_length):
    """Largest multiple-of-128 divisor of padded_batch that fits a VMEM
    budget, preferring an even grid-step count >= 2 (v7x has 2 TCs)."""
    budget = min(_vmem_capacity_bytes() // 2, 40 << 20)
    # rough live bytes per batch-lane: double-buffered z in/out tiles,
    # ~3 f32 compute copies of the (dim_pad, TB) tile, plus the log scratch.
    per_lane = 4 * (7 * dim_pad + 2 * flow_length + 4)
    cap = max(128, (budget // per_lane) // 128 * 128)

    best = 128
    t = 128
    while t <= padded_batch:
        if padded_batch % t == 0 and t <= cap:
            best = t
        t += 128

    steps = padded_batch // best
    if steps == 1 and padded_batch >= 256 and (padded_batch // 2) % 128 == 0:
        best = padded_batch // 2            # give both v7x TensorCores work
    elif steps % 2 == 1 and steps > 1:
        t = best - 128
        while t >= 128:
            if (padded_batch % t == 0 and (padded_batch // t) % 2 == 0
                    and 2 * t >= best):
                best = t
                break
            t -= 128
    return best


def normalizing_flow_forward(z, x0, log_alpha, beta, *, tile_batch=None):
    """Pallas wrapper reproducing NormalizingFlowDensity.forward (radial flows).

    z         : (batch, dim) float32
    x0        : (flow_length, dim)
    log_alpha : (flow_length,)
    beta      : (flow_length,)
    returns (z_out (batch, dim), sum_log_jacobians (batch,))
    """
    batch, dim = z.shape
    flow_length = x0.shape[0]

    z = jnp.asarray(z, jnp.float32)
    x0 = jnp.asarray(x0, jnp.float32)
    alpha = jnp.exp(jnp.asarray(log_alpha, jnp.float32))      # (flow_length,)
    beta_f = jnp.asarray(beta, jnp.float32)                   # (flow_length,)

    # Pad dim to a sublane multiple; zero columns are inert (add nothing to r)
    # and are sliced off the output.
    dim_pad = _round_up(dim, 8)
    if dim_pad != dim:
        z = jnp.pad(z, ((0, 0), (0, dim_pad - dim)))
        x0 = jnp.pad(x0, ((0, 0), (0, dim_pad - dim)))

    # Pad batch to a lane multiple so every store is lane-dense.
    padded_batch = _round_up(batch, 128)
    if padded_batch != batch:
        z = jnp.pad(z, ((0, padded_batch - batch), (0, 0)))

    if tile_batch is None:
        tile_batch = _pick_tile_batch(padded_batch, dim_pad, flow_length)
    assert padded_batch % tile_batch == 0

    x0T = x0.T                                   # (dim_pad, flow_length), tiny

    vmem_limit = min((_vmem_capacity_bytes() * 3) // 4, 100 << 20)

    kernel = functools.partial(
        radial_flow_kernel, flow_length=flow_length, true_dim=dim,
        use_mxu_reduce=dim_pad >= 128)

    grid = (padded_batch // tile_batch,)
    z_out, lj_out = pl.pallas_call(
        kernel,
        out_shape=(
            jax.ShapeDtypeStruct((padded_batch, dim_pad), jnp.float32),
            jax.ShapeDtypeStruct((1, padded_batch), jnp.float32),
        ),
        grid_spec=pltpu.PrefetchScalarGridSpec(
            num_scalar_prefetch=0,
            grid=grid,
            in_specs=[
                pl.BlockSpec((tile_batch, dim_pad), lambda i: (i, 0)),    # z
                pl.BlockSpec((dim_pad, flow_length), lambda i: (0, 0)),   # x0
                pl.BlockSpec(memory_space=pltpu.MemorySpace.SMEM),        # alpha
                pl.BlockSpec(memory_space=pltpu.MemorySpace.SMEM),        # beta
            ],
            out_specs=[
                pl.BlockSpec((tile_batch, dim_pad), lambda i: (i, 0)),    # z'
                pl.BlockSpec((1, tile_batch), lambda i: (0, i)),          # logJ
            ],
            scratch_shapes=[
                pltpu.VMEM((2 * flow_length, tile_batch), jnp.float32),
            ],
        ),
        compiler_params=pltpu.CompilerParams(
            dimension_semantics=("parallel",),
            vmem_limit_bytes=vmem_limit),
    )(z, x0T, alpha, beta_f)

    return z_out[:batch, :dim], lj_out[0, :batch]


def _reference_forward(z, x0, log_alpha, beta):
    """Pure-JAX reference (matches the PyTorch radial-flow forward)."""
    # TODO(synk): some Radial implementations reparameterize
    # beta_hat = -alpha + softplus(beta); both this reference and the kernel
    # use raw beta (self-consistent) — swap in the wrapper if needed.
    dim = z.shape[-1]
    log_j = jnp.zeros(z.shape[0], jnp.float32)
    for k in range(x0.shape[0]):
        alpha = jnp.exp(log_alpha[k])
        b = beta[k]
        z_sub = z - x0[k][None, :]
        r = jnp.linalg.norm(z_sub, axis=-1, keepdims=True)
        h = 1.0 / (alpha + r)
        z_new = z + b * h * z_sub
        log_det = ((dim - 1) * jnp.log1p(b * h) +
                   jnp.log1p(b * h - b * h * h * r))[:, 0]
        log_j = log_j + log_det
        z = z_new
    return z, log_j


if __name__ == "__main__":
    key = jax.random.PRNGKey(0)

    # (batch, dim, flow_length): lane-dense main case (2-step parallel grid)
    # plus a ragged case that exercises the batch/dim padding path.
    for (batch, dim, flow_length) in [(256, 32, 4), (100, 10, 3)]:
        kz, kx0, ka, kb, key = jax.random.split(key, 5)
        z = jax.random.normal(kz, (batch, dim), dtype=jnp.float32)
        x0 = 0.1 * jax.random.normal(kx0, (flow_length, dim), dtype=jnp.float32)
        log_alpha = 0.1 * jax.random.normal(ka, (flow_length,), dtype=jnp.float32)
        beta = 0.1 * jax.random.normal(kb, (flow_length,), dtype=jnp.float32)

        z_out, sum_log_jac = normalizing_flow_forward(z, x0, log_alpha, beta)
        jax.block_until_ready((z_out, sum_log_jac))

        z_ref, lj_ref = _reference_forward(z, x0, log_alpha, beta)
        np.testing.assert_allclose(np.asarray(z_out), np.asarray(z_ref),
                                   rtol=1e-5, atol=1e-5)
        np.testing.assert_allclose(np.asarray(sum_log_jac), np.asarray(lj_ref),
                                   rtol=1e-5, atol=1e-5)

    # TODO(synk): 'iaf_flow' (pyro affine_autoregressive MLP) and the
    # log_prob() path (BatchNorm1d / MultiheadAttention / MultivariateNormal)
    # live outside forward() and are not implemented here.
    print("KERNEL_OK")
</pallas_src>

<mosaic_0001>
module attributes {stable_mosaic.version = 11 : i64} {
  func.func @radial_flow_kernel(%arg0: i32, %arg1: memref<128x32xf32, #tpu.memory_space<vmem>>, %arg2: memref<32x4xf32, #tpu.memory_space<vmem>>, %arg3: memref<4xf32, #tpu.memory_space<smem>>, %arg4: memref<4xf32, #tpu.memory_space<smem>>, %arg5: memref<128x32xf32, #tpu.memory_space<vmem>>, %arg6: memref<1x128xf32, #tpu.memory_space<vmem>>, %arg7: memref<8x128xf32, #tpu.memory_space<vmem>>) attributes {dimension_semantics = [#tpu.dimension_semantics<parallel>], iteration_bounds = array<i64: 2>, scalar_prefetch = 0 : i64, scratch_operands = 1 : i64, tpu.core_type = #tpu.core_type<tc>, window_params = [{transform_indices = @transform_0, window_bounds = array<i64: 128, 32>}, {pipeline_mode = #tpu.pipeline_mode<synchronous>, transform_indices = @transform_1, window_bounds = array<i64: 32, 4>}, {transform_indices = @transform_2, window_bounds = array<i64: 4>}, {transform_indices = @transform_3, window_bounds = array<i64: 4>}, {transform_indices = @transform_4, window_bounds = array<i64: 128, 32>}, {transform_indices = @transform_5, window_bounds = array<i64: 1, 128>}]} {
    %c0 = arith.constant 0 : index
    %c0_0 = arith.constant 0 : index
    %0 = vector.load %arg1[%c0, %c0_0] : memref<128x32xf32, #tpu.memory_space<vmem>>, vector<128x32xf32>
    %1 = tpu.transpose %0, [1, 0] : vector<128x32xf32> -> vector<32x128xf32>
    %c0_1 = arith.constant 0 : index
    %2 = memref.load %arg3[%c0_1] : memref<4xf32, #tpu.memory_space<smem>>
    %c0_2 = arith.constant 0 : index
    %3 = memref.load %arg4[%c0_2] : memref<4xf32, #tpu.memory_space<smem>>
    %c0_3 = arith.constant 0 : index
    %c0_4 = arith.constant 0 : index
    %4 = vector.load %arg2[%c0_3, %c0_4] : memref<32x4xf32, #tpu.memory_space<vmem>>, vector<32x1xf32>
    %5 = vector.broadcast %4 : vector<32x1xf32> to vector<32x128xf32>
    %6 = arith.subf %1, %5 : vector<32x128xf32>
    %7 = arith.mulf %6, %6 : vector<32x128xf32>
    %cst = arith.constant dense<0.000000e+00> : vector<128xf32>
    %8 = vector.multi_reduction <add>, %7, %cst [0] : vector<32x128xf32> to vector<128xf32>
    %9 = vector.shape_cast %8 : vector<128xf32> to vector<1x128xf32>
    %10 = math.sqrt %9 : vector<1x128xf32>
    %11 = vector.broadcast %2 : f32 to vector<1x128xf32>
    %12 = arith.addf %11, %10 : vector<1x128xf32>
    %cst_5 = arith.constant 1.000000e+00 : f32
    %13 = vector.broadcast %cst_5 : f32 to vector<1x128xf32>
    %14 = arith.divf %13, %12 : vector<1x128xf32>
    %15 = vector.broadcast %3 : f32 to vector<1x128xf32>
    %16 = arith.mulf %15, %14 : vector<1x128xf32>
    %17 = vector.broadcast %16 : vector<1x128xf32> to vector<32x128xf32>
    %18 = arith.mulf %17, %6 : vector<32x128xf32>
    %19 = arith.addf %1, %18 : vector<32x128xf32>
    %c0_6 = arith.constant 0 : index
    %c0_7 = arith.constant 0 : index
    %20 = vector.load %arg7[%c0_6, %c0_7] : memref<8x128xf32, #tpu.memory_space<vmem>>, vector<1x128xf32>
    tpu.vector_store %arg7[%c0_6, %c0_7], %16 {strides = array<i32>} : memref<8x128xf32, #tpu.memory_space<vmem>>, vector<1x128xf32>,
    %21 = arith.mulf %3, %2 : f32
    %22 = arith.mulf %14, %14 : vector<1x128xf32>
    %23 = vector.broadcast %21 : f32 to vector<1x128xf32>
    %24 = arith.mulf %23, %22 : vector<1x128xf32>
    %c4 = arith.constant 4 : index
    %c0_8 = arith.constant 0 : index
    %25 = vector.load %arg7[%c4, %c0_8] : memref<8x128xf32, #tpu.memory_space<vmem>>, vector<1x128xf32>
    tpu.vector_store %arg7[%c4, %c0_8], %24 {strides = array<i32>} : memref<8x128xf32, #tpu.memory_space<vmem>>, vector<1x128xf32>,
    %c1 = arith.constant 1 : index
    %26 = memref.load %arg3[%c1] : memref<4xf32, #tpu.memory_space<smem>>
    %c1_9 = arith.constant 1 : index
    %27 = memref.load %arg4[%c1_9] : memref<4xf32, #tpu.memory_space<smem>>
    %c0_10 = arith.constant 0 : index
    %c1_11 = arith.constant 1 : index
    %28 = vector.load %arg2[%c0_10, %c1_11] : memref<32x4xf32, #tpu.memory_space<vmem>>, vector<32x1xf32>
    %29 = vector.broadcast %28 : vector<32x1xf32> to vector<32x128xf32>
    %30 = arith.subf %19, %29 : vector<32x128xf32>
    %31 = arith.mulf %30, %30 : vector<32x128xf32>
    %cst_12 = arith.constant dense<0.000000e+00> : vector<128xf32>
    %32 = vector.multi_reduction <add>, %31, %cst_12 [0] : vector<32x128xf32> to vector<128xf32>
    %33 = vector.shape_cast %32 : vector<128xf32> to vector<1x128xf32>
    %34 = math.sqrt %33 : vector<1x128xf32>
    %35 = vector.broadcast %26 : f32 to vector<1x128xf32>
    %36 = arith.addf %35, %34 : vector<1x128xf32>
    %cst_13 = arith.constant 1.000000e+00 : f32
    %37 = vector.broadcast %cst_13 : f32 to vector<1x128xf32>
    %38 = arith.divf %37, %36 : vector<1x128xf32>
    %39 = vector.broadcast %27 : f32 to vector<1x128xf32>
    %40 = arith.mulf %39, %38 : vector<1x128xf32>
    %41 = vector.broadcast %40 : vector<1x128xf32> to vector<32x128xf32>
    %42 = arith.mulf %41, %30 : vector<32x128xf32>
    %43 = arith.addf %19, %42 : vector<32x128xf32>
    %c1_14 = arith.constant 1 : index
    %c0_15 = arith.constant 0 : index
    %44 = vector.load %arg7[%c1_14, %c0_15] : memref<8x128xf32, #tpu.memory_space<vmem>>, vector<1x128xf32>
    tpu.vector_store %arg7[%c1_14, %c0_15], %40 {strides = array<i32>} : memref<8x128xf32, #tpu.memory_space<vmem>>, vector<1x128xf32>,
    %45 = arith.mulf %27, %26 : f32
    %46 = arith.mulf %38, %38 : vector<1x128xf32>
    %47 = vector.broadcast %45 : f32 to vector<1x128xf32>
    %48 = arith.mulf %47, %46 : vector<1x128xf32>
    %c5 = arith.constant 5 : index
    %c0_16 = arith.constant 0 : index
    %49 = vector.load %arg7[%c5, %c0_16] : memref<8x128xf32, #tpu.memory_space<vmem>>, vector<1x128xf32>
    tpu.vector_store %arg7[%c5, %c0_16], %48 {strides = array<i32>} : memref<8x128xf32, #tpu.memory_space<vmem>>, vector<1x128xf32>,
    %c2 = arith.constant 2 : index
    %50 = memref.load %arg3[%c2] : memref<4xf32, #tpu.memory_space<smem>>
    %c2_17 = arith.constant 2 : index
    %51 = memref.load %arg4[%c2_17] : memref<4xf32, #tpu.memory_space<smem>>
    %c0_18 = arith.constant 0 : index
    %c2_19 = arith.constant 2 : index
    %52 = vector.load %arg2[%c0_18, %c2_19] : memref<32x4xf32, #tpu.memory_space<vmem>>, vector<32x1xf32>
    %53 = vector.broadcast %52 : vector<32x1xf32> to vector<32x128xf32>
    %54 = arith.subf %43, %53 : vector<32x128xf32>
    %55 = arith.mulf %54, %54 : vector<32x128xf32>
    %cst_20 = arith.constant dense<0.000000e+00> : vector<128xf32>
    %56 = vector.multi_reduction <add>, %55, %cst_20 [0] : vector<32x128xf32> to vector<128xf32>
    %57 = vector.shape_cast %56 : vector<128xf32> to vector<1x128xf32>
    %58 = math.sqrt %57 : vector<1x128xf32>
    %59 = vector.broadcast %50 : f32 to vector<1x128xf32>
    %60 = arith.addf %59, %58 : vector<1x128xf32>
    %cst_21 = arith.constant 1.000000e+00 : f32
    %61 = vector.broadcast %cst_21 : f32 to vector<1x128xf32>
    %62 = arith.divf %61, %60 : vector<1x128xf32>
    %63 = vector.broadcast %51 : f32 to vector<1x128xf32>
    %64 = arith.mulf %63, %62 : vector<1x128xf32>
    %65 = vector.broadcast %64 : vector<1x128xf32> to vector<32x128xf32>
    %66 = arith.mulf %65, %54 : vector<32x128xf32>
    %67 = arith.addf %43, %66 : vector<32x128xf32>
    %c2_22 = arith.constant 2 : index
    %c0_23 = arith.constant 0 : index
    %68 = vector.load %arg7[%c2_22, %c0_23] : memref<8x128xf32, #tpu.memory_space<vmem>>, vector<1x128xf32>
    tpu.vector_store %arg7[%c2_22, %c0_23], %64 {strides = array<i32>} : memref<8x128xf32, #tpu.memory_space<vmem>>, vector<1x128xf32>,
    %69 = arith.mulf %51, %50 : f32
    %70 = arith.mulf %62, %62 : vector<1x128xf32>
    %71 = vector.broadcast %69 : f32 to vector<1x128xf32>
    %72 = arith.mulf %71, %70 : vector<1x128xf32>
    %c6 = arith.constant 6 : index
    %c0_24 = arith.constant 0 : index
    %73 = vector.load %arg7[%c6, %c0_24] : memref<8x128xf32, #tpu.memory_space<vmem>>, vector<1x128xf32>
    tpu.vector_store %arg7[%c6, %c0_24], %72 {strides = array<i32>} : memref<8x128xf32, #tpu.memory_space<vmem>>, vector<1x128xf32>,
    %c3 = arith.constant 3 : index
    %74 = memref.load %arg3[%c3] : memref<4xf32, #tpu.memory_space<smem>>
    %c3_25 = arith.constant 3 : index
    %75 = memref.load %arg4[%c3_25] : memref<4xf32, #tpu.memory_space<smem>>
    %c0_26 = arith.constant 0 : index
    %c3_27 = arith.constant 3 : index
    %76 = vector.load %arg2[%c0_26, %c3_27] : memref<32x4xf32, #tpu.memory_space<vmem>>, vector<32x1xf32>
    %77 = vector.broadcast %76 : vector<32x1xf32> to vector<32x128xf32>
    %78 = arith.subf %67, %77 : vector<32x128xf32>
    %79 = arith.mulf %78, %78 : vector<32x128xf32>
    %cst_28 = arith.constant dense<0.000000e+00> : vector<128xf32>
    %80 = vector.multi_reduction <add>, %79, %cst_28 [0] : vector<32x128xf32> to vector<128xf32>
    %81 = vector.shape_cast %80 : vector<128xf32> to vector<1x128xf32>
    %82 = math.sqrt %81 : vector<1x128xf32>
    %83 = vector.broadcast %74 : f32 to vector<1x128xf32>
    %84 = arith.addf %83, %82 : vector<1x128xf32>
    %cst_29 = arith.constant 1.000000e+00 : f32
    %85 = vector.broadcast %cst_29 : f32 to vector<1x128xf32>
    %86 = arith.divf %85, %84 : vector<1x128xf32>
    %87 = vector.broadcast %75 : f32 to vector<1x128xf32>
    %88 = arith.mulf %87, %86 : vector<1x128xf32>
    %89 = vector.broadcast %88 : vector<1x128xf32> to vector<32x128xf32>
    %90 = arith.mulf %89, %78 : vector<32x128xf32>
    %91 = arith.addf %67, %90 : vector<32x128xf32>
    %c3_30 = arith.constant 3 : index
    %c0_31 = arith.constant 0 : index
    %92 = vector.load %arg7[%c3_30, %c0_31] : memref<8x128xf32, #tpu.memory_space<vmem>>, vector<1x128xf32>
    tpu.vector_store %arg7[%c3_30, %c0_31], %88 {strides = array<i32>} : memref<8x128xf32, #tpu.memory_space<vmem>>, vector<1x128xf32>,
    %93 = arith.mulf %75, %74 : f32
    %94 = arith.mulf %86, %86 : vector<1x128xf32>
    %95 = vector.broadcast %93 : f32 to vector<1x128xf32>
    %96 = arith.mulf %95, %94 : vector<1x128xf32>
    %c7 = arith.constant 7 : index
    %c0_32 = arith.constant 0 : index
    %97 = vector.load %arg7[%c7, %c0_32] : memref<8x128xf32, #tpu.memory_space<vmem>>, vector<1x128xf32>
    tpu.vector_store %arg7[%c7, %c0_32], %96 {strides = array<i32>} : memref<8x128xf32, #tpu.memory_space<vmem>>, vector<1x128xf32>,
    %c0_33 = arith.constant 0 : index
    %c0_34 = arith.constant 0 : index
    %98 = vector.load %arg7[%c0_33, %c0_34] : memref<8x128xf32, #tpu.memory_space<vmem>>, vector<8x128xf32>
    %99 = math.log1p %98 : vector<8x128xf32>
    %100 = tpu.iota {dimensions = array<i32: 0>} : vector<8x1xi32>
    %c4_i32 = arith.constant 4 : i32
    %101 = vector.broadcast %c4_i32 : i32 to vector<8x1xi32>
    %102 = arith.cmpi slt, %100, %101 : vector<8x1xi32>
    %cst_35 = arith.constant 3.100000e+01 : f32
    %cst_36 = arith.constant 1.000000e+00 : f32
    %103 = vector.broadcast %cst_35 : f32 to vector<8x1xf32>
    %104 = vector.broadcast %cst_36 : f32 to vector<8x1xf32>
    %105 = arith.select %102, %103, %104 : vector<8x1xi1>, vector<8x1xf32>
    %106 = vector.broadcast %105 : vector<8x1xf32> to vector<8x128xf32>
    %107 = arith.mulf %106, %99 : vector<8x128xf32>
    %cst_37 = arith.constant dense<0.000000e+00> : vector<128xf32>
    %108 = vector.multi_reduction <add>, %107, %cst_37 [0] : vector<8x128xf32> to vector<128xf32>
    %109 = vector.shape_cast %108 : vector<128xf32> to vector<1x128xf32>
    %c0_38 = arith.constant 0 : index
    %c0_39 = arith.constant 0 : index
    %110 = vector.load %arg6[%c0_38, %c0_39] : memref<1x128xf32, #tpu.memory_space<vmem>>, vector<1x128xf32>
    tpu.vector_store %arg6[%c0_38, %c0_39], %109 {strides = array<i32>} : memref<1x128xf32, #tpu.memory_space<vmem>>, vector<1x128xf32>,
    %111 = tpu.transpose %91, [1, 0] : vector<32x128xf32> -> vector<128x32xf32>
    %c0_40 = arith.constant 0 : index
    %c0_41 = arith.constant 0 : index
    %112 = vector.load %arg5[%c0_40, %c0_41] : memref<128x32xf32, #tpu.memory_space<vmem>>, vector<128x32xf32>
    tpu.vector_store %arg5[%c0_40, %c0_41], %111 {strides = array<i32>} : memref<128x32xf32, #tpu.memory_space<vmem>>, vector<128x32xf32>,
    return
  }
  func.func @transform_0(%arg0: i32) -> (i32, i32) {
    %c0_i32 = arith.constant 0 : i32
    %c0_i32_0 = arith.constant 0 : i32
    return %arg0, %c0_i32 : i32, i32
  }
  func.func @transform_1(%arg0: i32) -> (i32, i32) {
    %c0_i32 = arith.constant 0 : i32
    %c0_i32_0 = arith.constant 0 : i32
    %c0_i32_1 = arith.constant 0 : i32
    return %c0_i32, %c0_i32_0 : i32, i32
  }
  func.func @transform_2(%arg0: i32) -> i32 {
    %c0_i32 = arith.constant 0 : i32
    %c0_i32_0 = arith.constant 0 : i32
    return %c0_i32 : i32
  }
  func.func @transform_3(%arg0: i32) -> i32 {
    %c0_i32 = arith.constant 0 : i32
    %c0_i32_0 = arith.constant 0 : i32
    return %c0_i32 : i32
  }
  func.func @transform_4(%arg0: i32) -> (i32, i32) {
    %c0_i32 = arith.constant 0 : i32
    %c0_i32_0 = arith.constant 0 : i32
    return %arg0, %c0_i32 : i32, i32
  }
  func.func @transform_5(%arg0: i32) -> (i32, i32) {
    %c0_i32 = arith.constant 0 : i32
    %c0_i32_0 = arith.constant 0 : i32
    return %c0_i32, %arg0 : i32, i32
  }
}

</mosaic_0001>

<llo_original>
// kernel: tpu_custom_call.1
$region0: #{tpu_custom_call.1}
  #allocation0 [shape = 'u32[]', space=smem, size = 0x4, offset = 0x4, fixed_abs, tag = 'smem constant byte address 0x4 - core index']
  #allocation1 [shape = 'u32[144,128]{1,0:T(1,128)}', space=vmem, size = 0x12000, scoped, tag = 'internal scratch']
  #allocation2 [shape = 'f32[8,128]{1,0:T(8,128)}', space=vmem, size = 0x1000, scoped, tag = 'scratch operand']
  %s0 = inlined_call_operand.vmem [shape: f32[256,32], index: 0, kind: input, shape index: {}]
  %s1 = inlined_call_operand.vmem [shape: f32[32,4], index: 1, kind: input, shape index: {}]
  %s2 = inlined_call_operand.vmem [shape: f32[4], index: 2, kind: input, shape index: {}]
  %s3 = inlined_call_operand.vmem [shape: f32[4], index: 3, kind: input, shape index: {}]
  %s4 = inlined_call_operand.vmem [shape: f32[256,32], index: 4, kind: output, shape index: {0}]
  %s5 = inlined_call_operand.hbm [shape: f32[1,256], index: 5, kind: output, shape index: {1}]
  %6 = xla_tuple %s4, %s5
  %s7 = sld [smem:[#allocation0]]
  $region65: #{tpu_custom_call.1} parent=0
    _
  %s9 = ssub.s32 1, %s7
  %s10 = scalar_select 0, %s9, %s7
  $region1: #{tpu_custom_call.1} parent=0
    #allocation3 [shape = 'u8[512]{0}', space=smem, size = 0x200, scoped, tag = 'input window, operand 2, single buffered']
    #allocation4 [shape = 's32[2]{0}', space=sflag, size = 0x8, scoped, tag = 'scoped memory for tpu_custom_call.1']
    #allocation5 [shape = 's32[2]{0}', space=sflag, size = 0x8, scoped, tag = 'scoped memory for tpu_custom_call.1']
    #allocation6 [shape = 'u8[512]{0}', space=smem, size = 0x200, scoped, tag = 'input window, operand 3, single buffered']
    #allocation7 [shape = 's32[1]{0}', space=sflag, size = 0x4, scoped, tag = 'scoped memory for tpu_custom_call.1']
    #allocation8 [shape = 'u8[1024]{0}', space=vmem, size = 0x400, scoped, tag = 'output window, operand 1']
    %11 = vsyncpa [#allocation5], 0
    %12 = vsyncpa [#allocation7], 0
    %13 = vsyncpa [#allocation4], 0
    %s14 = scalar_lea.sflag [#allocation4], 1
    %15 = vsyncpa %s14, 0
    loop: start=0, step=1, limit=4
    $region2: #{tpu_custom_call.1} parent=1 // loop_pre_header
      _
    $region3: #{tpu_custom_call.1} parent=1 // loop_header
      %s17 = sphi 0, %s21
      %p18 = scmp.ge.s32.totalorder %s17, 4
      %s27 = sphi 0, %s29
      %s30 = sphi 0, %s27
      %s31 = sphi 0, %s30
      %s47 = sphi 0, %s31
      %s51 = sphi 0, %s51
      %s53 = sphi 0, %s51
      %s54 = sphi 0, %s53
      %s68 = sphi 0, %s54
      %s72 = sphi 0, %s72
      %s74 = sphi 0, %s72
      %s75 = sphi 0, %s74
      %s89 = sphi 0, %s75
      %s93 = sphi 0, %s93
      %s95 = sphi 0, %s93
      %s96 = sphi 0, %s95
      %s110 = sphi 0, %s96
      %s116 = sphi 0, %s118
      %s119 = sphi 0, %s116
      %s120 = sphi 0, %s119
      %s136 = sphi 0, %s120
      %s142 = sphi 0, %s144
      %s145 = sphi 0, %s142
      %s146 = sphi 0, %s145
      %s162 = sphi 0, %s146
    $region4: #{tpu_custom_call.1} parent=1 // loop_header_branch
      %20 = sbr.rel (%p18) target = $region8
    $region5: #{tpu_custom_call.1} parent=1 // loop_body
      %s22 = ssub.s32 %s17, 1
      %s23 = ssub.s32 %s17, 2
      %s24 = sadd.s32 %s17, 1
      %s25 = ssub.s32 %s17, %s24
      %p26 = scmp.eq.s32.totalorder %s25, 0
      %s28 = sadd.s32 %s27, 1
      %s29 = scalar_select %p26, %s27, %s28
      %p32 = pneg %p26
      %p33 = scmp.eq.s32.totalorder %s17, 1
      %p34 = por %p32, %p33
      %p35 = scmp.ne.s32.totalorder %s27, %s30
      %p36 = scmp.eq.s32.totalorder %s17, 0
      %p37 = por %p35, %p36
      %p38 = scmp.ne.s32.totalorder %s27, %s30
      %p39 = scmp.eq.s32.totalorder %s22, 1
      %p40 = por %p38, %p39
      %p41 = scmp.ne.s32.totalorder %s30, %s31
      %p42 = scmp.eq.s32.totalorder %s22, 0
      %p43 = por %p41, %p42
      %p44 = scmp.ne.s32.totalorder %s30, %s31
      %p45 = scmp.eq.s32.totalorder %s23, 1
      %p46 = por %p44, %p45
      %p48 = scmp.ne.s32.totalorder %s31, %s47
      %p49 = scmp.eq.s32.totalorder %s23, 0
      %p50 = por %p48, %p49
      %s52 = sadd.s32 %s51, 1
      %p55 = scmp.eq.s32.totalorder %s17, 1
      %p56 = scmp.ne.s32.totalorder %s51, %s53
      %p57 = scmp.eq.s32.totalorder %s17, 0
      %p58 = por %p56, %p57
      %p59 = scmp.ne.s32.totalorder %s51, %s53
      %p60 = scmp.eq.s32.totalorder %s22, 1
      %p61 = por %p59, %p60
      %p62 = scmp.ne.s32.totalorder %s53, %s54
      %p63 = scmp.eq.s32.totalorder %s22, 0
      %p64 = por %p62, %p63
      %p65 = scmp.ne.s32.totalorder %s53, %s54
      %p66 = scmp.eq.s32.totalorder %s23, 1
      %p67 = por %p65, %p66
      %p69 = scmp.ne.s32.totalorder %s54, %s68
      %p70 = scmp.eq.s32.totalorder %s23, 0
      %p71 = por %p69, %p70
      %s73 = sadd.s32 %s72, 1
      %p76 = scmp.eq.s32.totalorder %s17, 1
      %p77 = scmp.ne.s32.totalorder %s72, %s74
      %p78 = scmp.eq.s32.totalorder %s17, 0
      %p79 = por %p77, %p78
      %p80 = scmp.ne.s32.totalorder %s72, %s74
      %p81 = scmp.eq.s32.totalorder %s22, 1
      %p82 = por %p80, %p81
      %p83 = scmp.ne.s32.totalorder %s74, %s75
      %p84 = scmp.eq.s32.totalorder %s22, 0
      %p85 = por %p83, %p84
      %p86 = scmp.ne.s32.totalorder %s74, %s75
      %p87 = scmp.eq.s32.totalorder %s23, 1
      %p88 = por %p86, %p87
      %p90 = scmp.ne.s32.totalorder %s75, %s89
      %p91 = scmp.eq.s32.totalorder %s23, 0
      %p92 = por %p90, %p91
      %s94 = sadd.s32 %s93, 1
      %p97 = scmp.eq.s32.totalorder %s17, 1
      %p98 = scmp.ne.s32.totalorder %s93, %s95
      %p99 = scmp.eq.s32.totalorder %s17, 0
      %p100 = por %p98, %p99
      %p101 = scmp.ne.s32.totalorder %s93, %s95
      %p102 = scmp.eq.s32.totalorder %s22, 1
      %p103 = por %p101, %p102
      %p104 = scmp.ne.s32.totalorder %s95, %s96
      %p105 = scmp.eq.s32.totalorder %s22, 0
      %p106 = por %p104, %p105
      %p107 = scmp.ne.s32.totalorder %s95, %s96
      %p108 = scmp.eq.s32.totalorder %s23, 1
      %p109 = por %p107, %p108
      %p111 = scmp.ne.s32.totalorder %s96, %s110
      %p112 = scmp.eq.s32.totalorder %s23, 0
      %p113 = por %p111, %p112
      %s114 = ssub.s32 %s17, %s24
      %p115 = scmp.eq.s32.totalorder %s114, 0
      %s117 = sadd.s32 %s116, 1
      %s118 = scalar_select %p115, %s116, %s117
      %p121 = pneg %p115
      %p122 = scmp.eq.s32.totalorder %s17, 1
      %p123 = por %p121, %p122
      %p124 = scmp.ne.s32.totalorder %s116, %s119
      %p125 = scmp.eq.s32.totalorder %s17, 0
      %p126 = por %p124, %p125
      %p127 = scmp.ne.s32.totalorder %s116, %s119
      %p128 = scmp.eq.s32.totalorder %s22, 1
      %p129 = por %p127, %p128
      %p130 = scmp.ne.s32.totalorder %s119, %s120
      %p131 = scmp.eq.s32.totalorder %s22, 0
      %p132 = por %p130, %p131
      %p133 = scmp.ne.s32.totalorder %s119, %s120
      %p134 = scmp.eq.s32.totalorder %s23, 1
      %p135 = por %p133, %p134
      %p137 = scmp.ne.s32.totalorder %s120, %s136
      %p138 = scmp.eq.s32.totalorder %s23, 0
      %p139 = por %p137, %p138
      %s140 = ssub.s32 %s17, %s24
      %p141 = scmp.eq.s32.totalorder %s140, 0
      %s143 = sadd.s32 %s142, 1
      %s144 = scalar_select %p141, %s142, %s143
      %p147 = pneg %p141
      %p148 = scmp.eq.s32.totalorder %s17, 1
      %p149 = por %p147, %p148
      %p150 = scmp.ne.s32.totalorder %s142, %s145
      %p151 = scmp.eq.s32.totalorder %s17, 0
      %p152 = por %p150, %p151
      %p153 = scmp.ne.s32.totalorder %s142, %s145
      %p154 = scmp.eq.s32.totalorder %s22, 1
      %p155 = por %p153, %p154
      %p156 = scmp.ne.s32.totalorder %s145, %s146
      %p157 = scmp.eq.s32.totalorder %s22, 0
      %p158 = por %p156, %p157
      %p159 = scmp.ne.s32.totalorder %s145, %s146
      %p160 = scmp.eq.s32.totalorder %s23, 1
      %p161 = por %p159, %p160
      %p163 = scmp.ne.s32.totalorder %s146, %s162
      %p164 = scmp.eq.s32.totalorder %s23, 0
      %p165 = por %p163, %p164
      %p166 = scmp.le.s32.totalorder 1, %s17
      %p167 = scmp.lt.s32.totalorder %s17, 3
      %p168 = pnand %p166, %p167
      %p169 = pneg %p168
      // Predicated region
      $region9: #{tpu_custom_call.1} parent=5 // pred_check
        _
      $region10: #{tpu_custom_call.1} parent=5 // pred_check_branch
        %171 = sbr.rel (%p168) target = $region12
      $region11: #{tpu_custom_call.1} parent=5 // pred_region
        %s172 = ssub.s32 %s17, 1
        // Predicated region
        $region13: #{tpu_custom_call.1} parent=11 // pred_check
          %p173 = pneg %p64
        $region14: #{tpu_custom_call.1} parent=11 // pred_check_branch
          %175 = sbr.rel (%p173) target = $region16
        $region15: #{tpu_custom_call.1} parent=11 // pred_region
          _
        $region16: #{tpu_custom_call.1} parent=11 // pred_fallthru
          _
        // Predicated region
        $region17: #{tpu_custom_call.1} parent=11 // pred_check
          %p176 = pneg %p85
        $region18: #{tpu_custom_call.1} parent=11 // pred_check_branch
          %178 = sbr.rel (%p176) target = $region20
        $region19: #{tpu_custom_call.1} parent=11 // pred_region
          %s180 = ssub.s32 16, 16
          %181 = vsyncadd [#allocation5], %s180
          %s183 = sshll.u32 %s2, 4
          %s184 = int_to_ptr.vmem [resolvable:$true] %s183
          %186 = dma.vmem_to_smem %s184, 16, [#allocation3], [#allocation5]
        $region20: #{tpu_custom_call.1} parent=11 // pred_fallthru
          _
        // Predicated region
        $region21: #{tpu_custom_call.1} parent=11 // pred_check
          %p187 = pneg %p106
        $region22: #{tpu_custom_call.1} parent=11 // pred_check_branch
          %189 = sbr.rel (%p187) target = $region24
        $region23: #{tpu_custom_call.1} parent=11 // pred_region
          %s191 = ssub.s32 16, 16
          %192 = vsyncadd [#allocation7], %s191
          %s194 = sshll.u32 %s3, 4
          %s195 = int_to_ptr.vmem [resolvable:$true] %s194
          %197 = dma.vmem_to_smem %s195, 16, [#allocation6], [#allocation7]
        $region24: #{tpu_custom_call.1} parent=11 // pred_fallthru
          _
      $region12: #{tpu_custom_call.1} parent=5 // pred_fallthru
        _
      %p198 = scmp.lt.s32.totalorder %s17, 2
      // Predicated region
      $region25: #{tpu_custom_call.1} parent=5 // pred_check
        %p199 = pneg %p198
      $region26: #{tpu_custom_call.1} parent=5 // pred_check_branch
        %201 = sbr.rel (%p199) target = $region28
      $region27: #{tpu_custom_call.1} parent=5 // pred_region
        // Predicated region
        $region29: #{tpu_custom_call.1} parent=27 // pred_check
          %p202 = pneg %p37
        $region30: #{tpu_custom_call.1} parent=27 // pred_check_branch
          %204 = sbr.rel (%p202) target = $region32
        $region31: #{tpu_custom_call.1} parent=27 // pred_region
          %s205 = smul.u32 16, %s17
          %p206 = scmp.lt.s32.totalorder %s205, 31
          %s207 = scalar_select %p206, %s205, 31
          %s208 = smul.addr %s207, 8
          %s209 = scalar_lea.vmem %s0, %s208
          %s210 = smul.u32 16, %s17
        $region32: #{tpu_custom_call.1} parent=27 // pred_fallthru
          _
      $region28: #{tpu_custom_call.1} parent=5 // pred_fallthru
        _
      %p211 = scmp.le.s32.totalorder 1, %s17
      %p212 = scmp.lt.s32.totalorder %s17, 3
      %p213 = pnand %p211, %p212
      %p214 = pneg %p213
      // Predicated region
      $region33: #{tpu_custom_call.1} parent=5 // pred_check
        _
      $region34: #{tpu_custom_call.1} parent=5 // pred_check_branch
        %216 = sbr.rel (%p213) target = $region36
      $region35: #{tpu_custom_call.1} parent=5 // pred_region
        %s217 = ssub.s32 %s17, 1
        // Predicated region
        $region37: #{tpu_custom_call.1} parent=35 // pred_check
          %p218 = pneg %p85
        $region38: #{tpu_custom_call.1} parent=35 // pred_check_branch
          %220 = sbr.rel (%p218) target = $region40
        $region39: #{tpu_custom_call.1} parent=35 // pred_region
          %221 = dma.done [#allocation5], 16
        $region40: #{tpu_custom_call.1} parent=35 // pred_fallthru
          _
        // Predicated region
        $region41: #{tpu_custom_call.1} parent=35 // pred_check
          %p222 = pneg %p106
        $region42: #{tpu_custom_call.1} parent=35 // pred_check_branch
          %224 = sbr.rel (%p222) target = $region44
        $region43: #{tpu_custom_call.1} parent=35 // pred_region
          %225 = dma.done [#allocation7], 16
        $region44: #{tpu_custom_call.1} parent=35 // pred_fallthru
          _
        %226 = sfence
        %s227 = smul.u32 16, %s22
        %p228 = scmp.lt.s32.totalorder %s227, 31
        %s229 = scalar_select %p228, %s227, 31
        %s230 = smul.addr %s229, 8
        %s231 = scalar_lea.vmem %s0, %s230
        %p232 = pneg %p43
        %p233 = pneg %p40
        %p234 = pneg %p64
        %p235 = pneg %p61
        %p236 = pneg %p85
        %p237 = pneg %p82
        %p238 = pneg %p106
        %p239 = pneg %p103
        %p240 = pneg %p132
        %p241 = pneg %p129
        %s242 = smul.u32 16, %s22
        %p243 = scmp.lt.s32.totalorder %s242, 31
        %s244 = scalar_select %p243, %s242, 31
        %s245 = smul.addr %s244, 8
        %s246 = scalar_lea.vmem %s4, %s245
        %p247 = pneg %p158
        %p248 = pneg %p155
        %s249 = sand.u32 %s145, 1
        %s250 = scalar_lea.sflag [#allocation4], %s249
        %s251 = sand.u32 %s145, 1
        %s252 = scalar_lea.vmem [#allocation8], %s251
        %s253 = smul.u32 16, %s22
        %p254 = scmp.lt.s32.totalorder %s253, 31
        %s255 = scalar_select %p254, %s253, 31
        %s256 = smul.addr %s255, 8
        %s257 = scalar_lea.vmem %s0, %s256
        %s258 = smul.u32 16, %s22
        %s259 = smul.u32 16, %s22
        %p260 = scmp.lt.s32.totalorder %s259, 31
        %s261 = scalar_select %p260, %s259, 31
        %s262 = smul.addr %s261, 8
        %s263 = scalar_lea.vmem %s4, %s262
        %s264 = smul.u32 16, %s22
        %v265 = vld [vmem:[%s257] sm:$0xff]
        %v266 = vld [vmem:[%s257 + $0x8] sm:$0xff]
        %v267 = vld [vmem:[%s257 + $0x10] sm:$0xff]
        %v268 = vld [vmem:[%s257 + $0x18] sm:$0xff]
        %v269 = vld [vmem:[%s257 + $0x20] sm:$0xff]
        %v270 = vld [vmem:[%s257 + $0x28] sm:$0xff]
        %v271 = vld [vmem:[%s257 + $0x30] sm:$0xff]
        %v272 = vld [vmem:[%s257 + $0x38] sm:$0xff]
        %v273 = vld [vmem:[%s257 + $0x40] sm:$0xff]
        %v274 = vld [vmem:[%s257 + $0x48] sm:$0xff]
        %v275 = vld [vmem:[%s257 + $0x50] sm:$0xff]
        %v276 = vld [vmem:[%s257 + $0x58] sm:$0xff]
        %v277 = vld [vmem:[%s257 + $0x60] sm:$0xff]
        %v278 = vld [vmem:[%s257 + $0x68] sm:$0xff]
        %v279 = vld [vmem:[%s257 + $0x70] sm:$0xff]
        %v280 = vld [vmem:[%s257 + $0x78] sm:$0xff]
        %281 = vxpose.xlu0.b32.start [1/16] %v265, 128
        %282 = vxpose.xlu0.b32.cont [2/16] %v266, 128
        %283 = vxpose.xlu0.b32.cont [3/16] %v267, 128
        %284 = vxpose.xlu0.b32.cont [4/16] %v268, 128
        %285 = vxpose.xlu0.b32.cont [5/16] %v269, 128
        %286 = vxpose.xlu0.b32.cont [6/16] %v270, 128
        %287 = vxpose.xlu0.b32.cont [7/16] %v271, 128
        %288 = vxpose.xlu0.b32.cont [8/16] %v272, 128
        %289 = vxpose.xlu0.b32.cont [9/16] %v273, 128
        %290 = vxpose.xlu0.b32.cont [10/16] %v274, 128
        %291 = vxpose.xlu0.b32.cont [11/16] %v275, 128
        %292 = vxpose.xlu0.b32.cont [12/16] %v276, 128
        %293 = vxpose.xlu0.b32.cont [13/16] %v277, 128
        %294 = vxpose.xlu0.b32.cont [14/16] %v278, 128
        %295 = vxpose.xlu0.b32.cont [15/16] %v279, 128
        %296 = vxpose.xlu0.b32.end [16/16] %v280, 128
        %v297 = vpop.trf.xlu0
        %v298 = vpop.trf.xlu0
        %v299 = vpop.trf.xlu0
        %v300 = vpop.trf.xlu0
        %v301 = vpop.trf.xlu0
        %v302 = vpop.trf.xlu0
        %v303 = vpop.trf.xlu0
        %v304 = vpop.trf.xlu0
        %v305 = vpop.trf.xlu0
        %v306 = vpop.trf.xlu0
        %v307 = vpop.trf.xlu0
        %v308 = vpop.trf.xlu0
        %v309 = vpop.trf.xlu0
        %v310 = vpop.trf.xlu0
        %v311 = vpop.trf.xlu0
        %v312 = vpop.trf.xlu0
        %s313 = sld [smem:[#allocation3]]
        %s314 = sld [smem:[#allocation6]]
        %v315 = vld [vmem:[%s1] sm:$0xff]
        %v316 = vld [vmem:[%s1 + $0x8] sm:$0xff]
        %v317 = vld [vmem:[%s1 + $0x10] sm:$0xff]
        %v318 = vld [vmem:[%s1 + $0x18] sm:$0xff]
        %320 = vset.pattern.permute.xlu0 0
        %321 = vperm.xlu0 %320, %v315
        %v322 = vpop.permute.xlu0 %321
        %325 = vset.pattern.permute.xlu0 0
        %326 = vperm.xlu0 %325, %v316
        %v327 = vpop.permute.xlu0 %326
        %330 = vset.pattern.permute.xlu0 0
        %331 = vperm.xlu0 %330, %v317
        %v332 = vpop.permute.xlu0 %331
        %335 = vset.pattern.permute.xlu0 0
        %336 = vperm.xlu0 %335, %v318
        %v337 = vpop.permute.xlu0 %336
        %v339 = vsub.f32 %v297, %v322
        %v340 = vsub.f32 %v298, %v327
        %v341 = vsub.f32 %v299, %v332
        %v342 = vsub.f32 %v300, %v337
        %v343 = vmul.f32 %v339, %v339
        %v344 = vmul.f32 %v340, %v340
        %v345 = vmul.f32 %v341, %v341
        %v346 = vmul.f32 %v342, %v342
        %v347 = vadd.f32 %v343, %v344
        %v348 = vadd.f32 %v347, %v345
        %v349 = vadd.f32 %v348, %v346
        %v350 = vrot.slane %v349, 4
        %v351 = vadd.f32 %v349, %v350
        %v352 = vrot.slane %v351, 2
        %v353 = vadd.f32 %v351, %v352
        %v354 = vrot.slane %v353, 1
        %v355 = vadd.f32 %v353, %v354
        %v356 = vrsqrt.pop %v355
        %v357 = vmul.f32 %v355, %v356
        %vm358 = vcmp.eq.f32.partialorder %v355, inf
        %v359 = vsel %vm358, %v355, %v357
        %vm360 = vcmp.eq.f32.partialorder %v355, 0.0
        %v361 = vand.u32 %v355, 2147483648
        %v362 = vsel %vm360, %v361, %v359
        %v363 = vstv %s313
        %v364 = vadd.f32 %v363, %v362
        %v365 = vrcp.pop %v364
        %v366 = vmul.f32 1.0, %v365
        %v367 = vstv %s314
        %v368 = vmul.f32 %v367, %v366
        %v369 = vmul.f32 %v368, %v339
        %v370 = vmul.f32 %v368, %v340
        %v371 = vmul.f32 %v368, %v341
        %v372 = vmul.f32 %v368, %v342
        %v373 = vadd.f32 %v297, %v369
        %v374 = vadd.f32 %v298, %v370
        %v375 = vadd.f32 %v299, %v371
        %v376 = vadd.f32 %v300, %v372
        %377 = vst [vmem:[#allocation2] sm:$0x1] %v368
        %s378 = smul.f32 %s314, %s313
        %v379 = vmul.f32 %v366, %v366
        %v380 = vstv %s378
        %v381 = vmul.f32 %v380, %v379
        %382 = vst [vmem:[#allocation2 + $0x4] sm:$0x1] %v381
        %s383 = sld [smem:[#allocation3 + $0x1]]
        %s384 = sld [smem:[#allocation6 + $0x1]]
        %v385 = vld [vmem:[%s1] sm:$0xff]
        %v386 = vld [vmem:[%s1 + $0x8] sm:$0xff]
        %v387 = vld [vmem:[%s1 + $0x10] sm:$0xff]
        %v388 = vld [vmem:[%s1 + $0x18] sm:$0xff]
        %390 = vset.pattern.permute.xlu0 1
        %391 = vperm.xlu0 %390, %v385
        %v392 = vpop.permute.xlu0 %391
        %395 = vset.pattern.permute.xlu0 1
        %396 = vperm.xlu0 %395, %v386
        %v397 = vpop.permute.xlu0 %396
        %400 = vset.pattern.permute.xlu0 1
        %401 = vperm.xlu0 %400, %v387
        %v402 = vpop.permute.xlu0 %401
        %405 = vset.pattern.permute.xlu0 1
        %406 = vperm.xlu0 %405, %v388
        %v407 = vpop.permute.xlu0 %406
        %v409 = vsub.f32 %v373, %v392
        %v410 = vsub.f32 %v374, %v397
        %v411 = vsub.f32 %v375, %v402
        %v412 = vsub.f32 %v376, %v407
        %v413 = vmul.f32 %v409, %v409
        %v414 = vmul.f32 %v410, %v410
        %v415 = vmul.f32 %v411, %v411
        %v416 = vmul.f32 %v412, %v412
        %v417 = vadd.f32 %v413, %v414
        %v418 = vadd.f32 %v417, %v415
        %v419 = vadd.f32 %v418, %v416
        %v420 = vrot.slane %v419, 4
        %v421 = vadd.f32 %v419, %v420
        %v422 = vrot.slane %v421, 2
        %v423 = vadd.f32 %v421, %v422
        %v424 = vrot.slane %v423, 1
        %v425 = vadd.f32 %v423, %v424
        %v426 = vrsqrt.pop %v425
        %v427 = vmul.f32 %v425, %v426
        %vm428 = vcmp.eq.f32.partialorder %v425, inf
        %v429 = vsel %vm428, %v425, %v427
        %vm430 = vcmp.eq.f32.partialorder %v425, 0.0
        %v431 = vand.u32 %v425, 2147483648
        %v432 = vsel %vm430, %v431, %v429
        %v433 = vstv %s383
        %v434 = vadd.f32 %v433, %v432
        %v435 = vrcp.pop %v434
        %v436 = vmul.f32 1.0, %v435
        %v437 = vstv %s384
        %v438 = vmul.f32 %v437, %v436
        %v439 = vmul.f32 %v438, %v409
        %v440 = vmul.f32 %v438, %v410
        %v441 = vmul.f32 %v438, %v411
        %v442 = vmul.f32 %v438, %v412
        %v443 = vadd.f32 %v373, %v439
        %v444 = vadd.f32 %v374, %v440
        %v445 = vadd.f32 %v375, %v441
        %v446 = vadd.f32 %v376, %v442
        %447 = vst [vmem:[#allocation2 + $0x1] sm:$0x1] %v438
        %s448 = smul.f32 %s384, %s383
        %v449 = vmul.f32 %v436, %v436
        %v450 = vstv %s448
        %v451 = vmul.f32 %v450, %v449
        %452 = vst [vmem:[#allocation2 + $0x5] sm:$0x1] %v451
        %s453 = sld [smem:[#allocation3 + $0x2]]
        %s454 = sld [smem:[#allocation6 + $0x2]]
        %v455 = vld [vmem:[%s1] sm:$0xff]
        %v456 = vld [vmem:[%s1 + $0x8] sm:$0xff]
        %v457 = vld [vmem:[%s1 + $0x10] sm:$0xff]
        %v458 = vld [vmem:[%s1 + $0x18] sm:$0xff]
        %460 = vset.pattern.permute.xlu0 2
        %461 = vperm.xlu0 %460, %v455
        %v462 = vpop.permute.xlu0 %461
        %465 = vset.pattern.permute.xlu0 2
        %466 = vperm.xlu0 %465, %v456
        %v467 = vpop.permute.xlu0 %466
        %470 = vset.pattern.permute.xlu0 2
        %471 = vperm.xlu0 %470, %v457
        %v472 = vpop.permute.xlu0 %471
        %475 = vset.pattern.permute.xlu0 2
        %476 = vperm.xlu0 %475, %v458
        %v477 = vpop.permute.xlu0 %476
        %v479 = vsub.f32 %v443, %v462
        %v480 = vsub.f32 %v444, %v467
        %v481 = vsub.f32 %v445, %v472
        %v482 = vsub.f32 %v446, %v477
        %v483 = vmul.f32 %v479, %v479
        %v484 = vmul.f32 %v480, %v480
        %v485 = vmul.f32 %v481, %v481
        %v486 = vmul.f32 %v482, %v482
        %v487 = vadd.f32 %v483, %v484
        %v488 = vadd.f32 %v487, %v485
        %v489 = vadd.f32 %v488, %v486
        %v490 = vrot.slane %v489, 4
        %v491 = vadd.f32 %v489, %v490
        %v492 = vrot.slane %v491, 2
        %v493 = vadd.f32 %v491, %v492
        %v494 = vrot.slane %v493, 1
        %v495 = vadd.f32 %v493, %v494
        %v496 = vrsqrt.pop %v495
        %v497 = vmul.f32 %v495, %v496
        %vm498 = vcmp.eq.f32.partialorder %v495, inf
        %v499 = vsel %vm498, %v495, %v497
        %vm500 = vcmp.eq.f32.partialorder %v495, 0.0
        %v501 = vand.u32 %v495, 2147483648
        %v502 = vsel %vm500, %v501, %v499
        %v503 = vstv %s453
        %v504 = vadd.f32 %v503, %v502
        %v505 = vrcp.pop %v504
        %v506 = vmul.f32 1.0, %v505
        %v507 = vstv %s454
        %v508 = vmul.f32 %v507, %v506
        %v509 = vmul.f32 %v508, %v479
        %v510 = vmul.f32 %v508, %v480
        %v511 = vmul.f32 %v508, %v481
        %v512 = vmul.f32 %v508, %v482
        %v513 = vadd.f32 %v443, %v509
        %v514 = vadd.f32 %v444, %v510
        %v515 = vadd.f32 %v445, %v511
        %v516 = vadd.f32 %v446, %v512
        %517 = vst [vmem:[#allocation2 + $0x2] sm:$0x1] %v508
        %s518 = smul.f32 %s454, %s453
        %v519 = vmul.f32 %v506, %v506
        %v520 = vstv %s518
        %v521 = vmul.f32 %v520, %v519
        %522 = vst [vmem:[#allocation2 + $0x6] sm:$0x1] %v521
        %s523 = sld [smem:[#allocation3 + $0x3]]
        %s524 = sld [smem:[#allocation6 + $0x3]]
        %v525 = vld [vmem:[%s1] sm:$0xff]
        %v526 = vld [vmem:[%s1 + $0x8] sm:$0xff]
        %v527 = vld [vmem:[%s1 + $0x10] sm:$0xff]
        %v528 = vld [vmem:[%s1 + $0x18] sm:$0xff]
        %530 = vset.pattern.permute.xlu0 3
        %531 = vperm.xlu0 %530, %v525
        %v532 = vpop.permute.xlu0 %531
        %535 = vset.pattern.permute.xlu0 3
        %536 = vperm.xlu0 %535, %v526
        %v537 = vpop.permute.xlu0 %536
        %540 = vset.pattern.permute.xlu0 3
        %541 = vperm.xlu0 %540, %v527
        %v542 = vpop.permute.xlu0 %541
        %545 = vset.pattern.permute.xlu0 3
        %546 = vperm.xlu0 %545, %v528
        %v547 = vpop.permute.xlu0 %546
        %v549 = vsub.f32 %v513, %v532
        %v550 = vsub.f32 %v514, %v537
        %v551 = vsub.f32 %v515, %v542
        %v552 = vsub.f32 %v516, %v547
        %v553 = vmul.f32 %v549, %v549
        %v554 = vmul.f32 %v550, %v550
        %v555 = vmul.f32 %v551, %v551
        %v556 = vmul.f32 %v552, %v552
        %v557 = vadd.f32 %v553, %v554
        %v558 = vadd.f32 %v557, %v555
        %v559 = vadd.f32 %v558, %v556
        %v560 = vrot.slane %v559, 4
        %v561 = vadd.f32 %v559, %v560
        %v562 = vrot.slane %v561, 2
        %v563 = vadd.f32 %v561, %v562
        %v564 = vrot.slane %v563, 1
        %v565 = vadd.f32 %v563, %v564
        %v566 = vrsqrt.pop %v565
        %v567 = vmul.f32 %v565, %v566
        %vm568 = vcmp.eq.f32.partialorder %v565, inf
        %v569 = vsel %vm568, %v565, %v567
        %vm570 = vcmp.eq.f32.partialorder %v565, 0.0
        %v571 = vand.u32 %v565, 2147483648
        %v572 = vsel %vm570, %v571, %v569
        %v573 = vstv %s523
        %v574 = vadd.f32 %v573, %v572
        %v575 = vrcp.pop %v574
        %v576 = vmul.f32 1.0, %v575
        %v577 = vstv %s524
        %v578 = vmul.f32 %v577, %v576
        %v579 = vmul.f32 %v578, %v549
        %v580 = vmul.f32 %v578, %v550
        %v581 = vmul.f32 %v578, %v551
        %v582 = vmul.f32 %v578, %v552
        %v583 = vadd.f32 %v513, %v579
        %v584 = vadd.f32 %v514, %v580
        %v585 = vadd.f32 %v515, %v581
        %v586 = vadd.f32 %v516, %v582
        %587 = vst [vmem:[#allocation2 + $0x3] sm:$0x1] %v578
        %s588 = smul.f32 %s524, %s523
        %v589 = vmul.f32 %v576, %v576
        %v590 = vstv %s588
        %v591 = vmul.f32 %v590, %v589
        %592 = vst [vmem:[#allocation2 + $0x7] sm:$0x1] %v591
        %v593 = vld [vmem:[#allocation2] sm:$0xff]
        %v594 = vadd.f32 %v593, 1.0
        %v595 = vlog2.pop %v594
        %v596 = vmul.f32 %v595, 0.6931472
        %v597 = vmul.f32 -0.5, %v593
        %v598 = vadd.f32 %v597, 1.0
        %v599 = vmul.f32 %v598, %v593
        %v600 = vand.u32 2147483647, %v593
        %vm601 = vcmp.lt.f32.partialorder %v600, 0.0004427343
        %v602 = vsel %vm601, %v599, %v596
        %v603 = vlaneseq
        %v604 = vshrl.u32 %v603, 7
        %vm605 = vcmp.lt.s32.totalorder %v604, 4
        %v606 = vsel %vm605, 31.0, 1.0
        %v607 = vmul.f32 %v606, %v602
        %v608 = vrot.slane %v607, 4
        %v609 = vadd.f32 %v607, %v608
        %v610 = vrot.slane %v609, 2
        %v611 = vadd.f32 %v609, %v610
        %v612 = vrot.slane %v611, 1
        %v613 = vadd.f32 %v611, %v612
        %614 = vst [vmem:[%s252] sm:$0x1] %v613
        %615 = vxpose.xlu0.b32.start [1/16] %v583, 128
        %616 = vxpose.xlu0.b32.cont [2/16] %v584, 128
        %617 = vxpose.xlu0.b32.cont [3/16] %v585, 128
        %618 = vxpose.xlu0.b32.cont [4/16] %v586, 128
        %619 = vxpose.xlu0.b32.cont [5/16] 0.0, 128
        %620 = vxpose.xlu0.b32.cont [6/16] 0.0, 128
        %621 = vxpose.xlu0.b32.cont [7/16] 0.0, 128
        %622 = vxpose.xlu0.b32.cont [8/16] 0.0, 128
        %623 = vxpose.xlu0.b32.cont [9/16] 0.0, 128
        %624 = vxpose.xlu0.b32.cont [10/16] 0.0, 128
        %625 = vxpose.xlu0.b32.cont [11/16] 0.0, 128
        %626 = vxpose.xlu0.b32.cont [12/16] 0.0, 128
        %627 = vxpose.xlu0.b32.cont [13/16] 0.0, 128
        %628 = vxpose.xlu0.b32.cont [14/16] 0.0, 128
        %629 = vxpose.xlu0.b32.cont [15/16] 0.0, 128
        %630 = vxpose.xlu0.b32.end [16/16] 0.0, 128
        %v631 = vpop.trf.xlu0
        %v632 = vpop.trf.xlu0
        %v633 = vpop.trf.xlu0
        %v634 = vpop.trf.xlu0
        %v635 = vpop.trf.xlu0
        %v636 = vpop.trf.xlu0
        %v637 = vpop.trf.xlu0
        %v638 = vpop.trf.xlu0
        %v639 = vpop.trf.xlu0
        %v640 = vpop.trf.xlu0
        %v641 = vpop.trf.xlu0
        %v642 = vpop.trf.xlu0
        %v643 = vpop.trf.xlu0
        %v644 = vpop.trf.xlu0
        %v645 = vpop.trf.xlu0
        %v646 = vpop.trf.xlu0
        %vm647 = vcmask 261120
        %648 = vst.msk [vmem:[%s263] sm:$0xff] %vm647, %v631
        %649 = vst.msk [vmem:[%s263 + $0x8] sm:$0xff] %vm647, %v632
        %650 = vst.msk [vmem:[%s263 + $0x10] sm:$0xff] %vm647, %v633
        %651 = vst.msk [vmem:[%s263 + $0x18] sm:$0xff] %vm647, %v634
        %652 = vst.msk [vmem:[%s263 + $0x20] sm:$0xff] %vm647, %v635
        %653 = vst.msk [vmem:[%s263 + $0x28] sm:$0xff] %vm647, %v636
        %654 = vst.msk [vmem:[%s263 + $0x30] sm:$0xff] %vm647, %v637
        %655 = vst.msk [vmem:[%s263 + $0x38] sm:$0xff] %vm647, %v638
        %656 = vst.msk [vmem:[%s263 + $0x40] sm:$0xff] %vm647, %v639
        %657 = vst.msk [vmem:[%s263 + $0x48] sm:$0xff] %vm647, %v640
        %658 = vst.msk [vmem:[%s263 + $0x50] sm:$0xff] %vm647, %v641
        %659 = vst.msk [vmem:[%s263 + $0x58] sm:$0xff] %vm647, %v642
        %660 = vst.msk [vmem:[%s263 + $0x60] sm:$0xff] %vm647, %v643
        %661 = vst.msk [vmem:[%s263 + $0x68] sm:$0xff] %vm647, %v644
        %662 = vst.msk [vmem:[%s263 + $0x70] sm:$0xff] %vm647, %v645
        %663 = vst.msk [vmem:[%s263 + $0x78] sm:$0xff] %vm647, %v646
        %s664 = smul.u32 16, %s22
        %p665 = scmp.lt.s32.totalorder %s664, 31
        %s666 = scalar_select %p665, %s664, 31
        %s667 = smul.addr %s666, 8
        %s668 = scalar_lea.vmem %s4, %s667
        %s669 = sand.u32 %s145, 1
        %s670 = scalar_lea.sflag [#allocation4], %s669
        %s671 = sand.u32 %s145, 1
        %s672 = scalar_lea.vmem [#allocation8], %s671
        // Predicated region
        $region45: #{tpu_custom_call.1} parent=35 // pred_check
          %p673 = pneg %p129
        $region46: #{tpu_custom_call.1} parent=35 // pred_check_branch
          %675 = sbr.rel (%p673) target = $region48
        $region47: #{tpu_custom_call.1} parent=35 // pred_region
          %s676 = smul.u32 16, %s22
        $region48: #{tpu_custom_call.1} parent=35 // pred_fallthru
          _
        // Predicated region
        $region49: #{tpu_custom_call.1} parent=35 // pred_check
          %p677 = pneg %p155
        $region50: #{tpu_custom_call.1} parent=35 // pred_check_branch
          %679 = sbr.rel (%p677) target = $region52
        $region51: #{tpu_custom_call.1} parent=35 // pred_region
          %s681 = ssub.s32 16, 16
          %682 = vsyncadd %s670, %s681
          %s683 = smul.addr %s22, 16
          %s684 = scalar_lea.hbm %s5, %s683
          %s686 = sshll.u32 %s672, 4
          %s687 = int_to_ptr.vmem [resolvable:$true] %s686
          %689 = dma.vmem_to_hbm [thread:$0]  %s687, 16, %s684, %s670
        $region52: #{tpu_custom_call.1} parent=35 // pred_fallthru
          _
      $region36: #{tpu_custom_call.1} parent=5 // pred_fallthru
        _
      %p690 = scmp.le.s32.totalorder 2, %s17
      // Predicated region
      $region53: #{tpu_custom_call.1} parent=5 // pred_check
        %p691 = pneg %p690
      $region54: #{tpu_custom_call.1} parent=5 // pred_check_branch
        %693 = sbr.rel (%p691) target = $region56
      $region55: #{tpu_custom_call.1} parent=5 // pred_region
        %s694 = ssub.s32 %s17, 2
        // Predicated region
        $region57: #{tpu_custom_call.1} parent=55 // pred_check
          %p695 = pneg %p135
        $region58: #{tpu_custom_call.1} parent=55 // pred_check_branch
          %697 = sbr.rel (%p695) target = $region60
        $region59: #{tpu_custom_call.1} parent=55 // pred_region
          %s698 = smul.u32 16, %s23
          %p699 = scmp.lt.s32.totalorder %s698, 31
          %s700 = scalar_select %p699, %s698, 31
          %s701 = smul.addr %s700, 8
          %s702 = scalar_lea.vmem %s4, %s701
        $region60: #{tpu_custom_call.1} parent=55 // pred_fallthru
          _
        // Predicated region
        $region61: #{tpu_custom_call.1} parent=55 // pred_check
          %p703 = pneg %p161
        $region62: #{tpu_custom_call.1} parent=55 // pred_check_branch
          %705 = sbr.rel (%p703) target = $region64
        $region63: #{tpu_custom_call.1} parent=55 // pred_region
          %s706 = sand.u32 %s146, 1
          %s707 = scalar_lea.sflag [#allocation4], %s706
          %s708 = sand.u32 %s146, 1
          %s709 = scalar_lea.vmem [#allocation8], %s708
          %710 = dma.done %s707, 16
        $region64: #{tpu_custom_call.1} parent=55 // pred_fallthru
          _
      $region56: #{tpu_custom_call.1} parent=5 // pred_fallthru
        _
    $region6: #{tpu_custom_call.1} parent=1 // loop_footer
      %s21 = sadd.s32 1, %s17
    $region7: #{tpu_custom_call.1} parent=1 // loop_footer_branch
      %16 = sbr.rel target = $region3
    $region8: #{tpu_custom_call.1} parent=1 // loop_exit
      _
    %711 = vsyncpa [#allocation4], 1
    %s712 = scalar_lea.sflag [#allocation4], 1
    %713 = vsyncpa %s712, 1
    %714 = vsyncpa [#allocation5], 1
    %s715 = scalar_lea.sflag [#allocation5], 1
    %716 = vsyncpa %s715, 1
    %717 = vsyncpa [#allocation7], 1

</llo_original>
